<compile_context>
chip_gen: v5e
topology: v5e:2x2
jax: 0.10.0
libtpu: 0.0.40
codegen_flags: <defaults>
</compile_context>

<pallas_src>
import functools

import jax
import jax.numpy as jnp
from jax.experimental import pallas as pl
from jax.experimental.pallas import tpu as pltpu

EPS = 1e-5
LANE = 128


def _round_up(x, m):
    return (x + m - 1) // m * m


def _prenorm_linear_kernel(x_ref, gamma_ref, beta_ref, w_ref, bias_ref,
                           o_ref, y_ref, *, d_orig, d_pad):
    """Grid = (token tiles i, output-column tiles j).

    x_ref:     (tm, Dp)   token tile (input dtype)
    gamma_ref: (1, Dp)    LayerNorm weight (f32, zero-padded)
    beta_ref:  (1, Dp)    LayerNorm bias   (f32, zero-padded)
    w_ref:     (Dp, tn)   Linear weight slab, pre-transposed (W.T), bf16
    bias_ref:  (1, tn)    Linear bias slab (f32)
    o_ref:     (tm, tn)   output tile
    y_ref:     (tm, Dp)   bf16 scratch holding LayerNorm(x) for the row tile
    """
    # Compute the LayerNorm once per row tile (first column step) and cache it.
    @pl.when(pl.program_id(1) == 0)
    def _():
        x = x_ref[...].astype(jnp.float32)
        if d_orig == d_pad:
            mean = jnp.mean(x, axis=-1, keepdims=True)
            centered = x - mean
            var = jnp.mean(centered * centered, axis=-1, keepdims=True)
        else:
            # Hidden dim was padded to a lane multiple: mask the statistics.
            lane = jax.lax.broadcasted_iota(jnp.int32, x.shape, 1)
            mask = lane < d_orig
            inv_d = 1.0 / float(d_orig)
            xm = jnp.where(mask, x, 0.0)
            mean = jnp.sum(xm, axis=-1, keepdims=True) * inv_d
            centered = jnp.where(mask, x - mean, 0.0)
            var = jnp.sum(centered * centered, axis=-1, keepdims=True) * inv_d
        x_hat = centered * jax.lax.rsqrt(var + EPS)
        # gamma/beta are zero in padded lanes -> y is exactly 0 there.
        y = (x_hat * gamma_ref[...].astype(jnp.float32)
             + beta_ref[...].astype(jnp.float32))
        y_ref[...] = y.astype(y_ref.dtype)

    # fn = Linear(dim, dim): out = LN(x) @ W.T + b   (bf16 MXU, f32 accumulate)
    out = jnp.dot(y_ref[...], w_ref[...], preferred_element_type=jnp.float32)
    out = out + bias_ref[...].astype(jnp.float32)
    o_ref[...] = out.astype(o_ref.dtype)


def _vmem_estimate(tm, tn, d_pad, in_itemsize, out_itemsize):
    return (2 * tm * d_pad * in_itemsize    # x tiles (double-buffered)
            + 2 * tm * tn * out_itemsize    # out tiles
            + 2 * d_pad * tn * 2            # W tiles (bf16)
            + 2 * 3 * d_pad * 4             # gamma / beta / bias
            + tm * d_pad * 2)               # y scratch (bf16)


def prenorm_linear(x, gamma, beta, w, bias, *, tm=512, tn=512):
    """x: [B, S, D] -> [B, S, D].  `w` is W.T, shape (D_in, D_out)."""
    B, S, D = x.shape
    M = B * S
    in_itemsize = jnp.dtype(x.dtype).itemsize

    # Pad the hidden dim to a lane multiple; choose a column tile dividing it.
    d_pad = max(LANE, _round_up(D, LANE))
    tn = min(tn, d_pad)
    while d_pad % tn:                       # tn must divide d_pad (both *128)
        tn -= LANE

    # Row tile: don't over-pad tiny inputs; shrink if VMEM would overflow v7x.
    tm = min(tm, _round_up(M, 8))
    vmem_budget = 40 << 20
    while tm > 64 and _vmem_estimate(tm, tn, d_pad, in_itemsize,
                                     in_itemsize) > vmem_budget:
        tm //= 2
    tm = max(8, _round_up(tm, 8))
    m_pad = _round_up(M, tm)

    x2d = jnp.pad(x.reshape(M, D), ((0, m_pad - M), (0, d_pad - D)))
    gamma2d = jnp.pad(gamma.astype(jnp.float32).reshape(1, D),
                      ((0, 0), (0, d_pad - D)))
    beta2d = jnp.pad(beta.astype(jnp.float32).reshape(1, D),
                     ((0, 0), (0, d_pad - D)))
    bias2d = jnp.pad(bias.astype(jnp.float32).reshape(1, D),
                     ((0, 0), (0, d_pad - D)))
    w_bf16 = jnp.pad(w, ((0, d_pad - D), (0, d_pad - D))).astype(jnp.bfloat16)

    grid = (m_pad // tm, d_pad // tn)

    cost = pl.CostEstimate(
        flops=2 * M * D * D + 8 * M * D,
        transcendentals=M,                       # one rsqrt per token
        bytes_accessed=2 * M * D * in_itemsize + D * D * 2 + 3 * D * 4,
    )

    vmem_limit = max(
        16 << 20,
        min(_vmem_estimate(tm, tn, d_pad, in_itemsize, in_itemsize)
            + (4 << 20), 64 << 20))

    kernel = functools.partial(_prenorm_linear_kernel, d_orig=D, d_pad=d_pad)

    out2d = pl.pallas_call(
        kernel,
        out_shape=jax.ShapeDtypeStruct((m_pad, d_pad), x.dtype),
        grid_spec=pltpu.PrefetchScalarGridSpec(
            num_scalar_prefetch=0,
            grid=grid,
            in_specs=[
                pl.BlockSpec((tm, d_pad), lambda i, j: (i, 0)),   # x tile
                pl.BlockSpec((1, d_pad), lambda i, j: (0, 0)),    # gamma
                pl.BlockSpec((1, d_pad), lambda i, j: (0, 0)),    # beta
                pl.BlockSpec((d_pad, tn), lambda i, j: (0, j)),   # W.T (bf16)
                pl.BlockSpec((1, tn), lambda i, j: (0, j)),       # bias
            ],
            out_specs=pl.BlockSpec((tm, tn), lambda i, j: (i, j)),
            scratch_shapes=[pltpu.VMEM((tm, d_pad), jnp.bfloat16)],
        ),
        compiler_params=pltpu.CompilerParams(
            dimension_semantics=("parallel", "arbitrary"),
            vmem_limit_bytes=vmem_limit,
        ),
        cost_estimate=cost,
    )(x2d, gamma2d, beta2d, w_bf16, bias2d)

    return out2d[:M, :D].reshape(B, S, D)


def prenorm_linear_ref(x, gamma, beta, w, bias):
    """Pure-f32 reference matching torch: Linear(LayerNorm(x))."""
    xf = x.astype(jnp.float32)
    mean = jnp.mean(xf, axis=-1, keepdims=True)
    var = jnp.mean((xf - mean) ** 2, axis=-1, keepdims=True)
    y = (xf - mean) / jnp.sqrt(var + EPS) * gamma + beta
    return (y @ w + bias).astype(x.dtype)


def prenorm_linear_ref_bf16(x, gamma, beta, w, bias):
    """Reference with the same numerics as the kernel (bf16 MXU matmul)."""
    xf = x.astype(jnp.float32)
    mean = jnp.mean(xf, axis=-1, keepdims=True)
    var = jnp.mean((xf - mean) ** 2, axis=-1, keepdims=True)
    y = (xf - mean) * jax.lax.rsqrt(var + EPS) * gamma + beta
    out = jnp.dot(y.astype(jnp.bfloat16), w.astype(jnp.bfloat16),
                  preferred_element_type=jnp.float32) + bias
    return out.astype(x.dtype)


if __name__ == "__main__":
    key = jax.random.PRNGKey(0)
    k_x, k_g, k_b, k_w, k_bb = jax.random.split(key, 5)

    B, S, D = 2, 8, 32  # batch=2, seq=8, hidden(dim)=32

    x = jax.random.normal(k_x, (B, S, D), dtype=jnp.float32)

    # LayerNorm params (torch init: weight=1, bias=0) -- perturbed slightly so
    # the affine path is exercised.
    gamma = jnp.ones((D,), jnp.float32) + 0.01 * jax.random.normal(k_g, (D,))
    beta = 0.01 * jax.random.normal(k_b, (D,))

    # fn = Linear(D, D); store W.T directly as (D_in, D_out).
    w_t = 0.1 * jax.random.normal(k_w, (D, D), dtype=jnp.float32)
    bias = 0.1 * jax.random.normal(k_bb, (D,), dtype=jnp.float32)

    out = jax.block_until_ready(prenorm_linear(x, gamma, beta, w_t, bias))

    ref_matched = prenorm_linear_ref_bf16(x, gamma, beta, w_t, bias)
    ref_f32 = prenorm_linear_ref(x, gamma, beta, w_t, bias)

    assert out.shape == (B, S, D)
    # Tight check vs. a reference using the same (bf16 matmul) numerics.
    assert jnp.allclose(out, ref_matched, atol=1e-4, rtol=1e-4), \
        "mismatch vs bf16-matched reference"
    # Loose semantic check vs. the pure-f32 torch-equivalent reference.
    assert jnp.allclose(out, ref_f32, atol=2e-2, rtol=2e-2), \
        "mismatch vs f32 reference"

    print("KERNEL_OK")
</pallas_src>

<mosaic_0001>
module attributes {stable_mosaic.version = 11 : i64} {
  func.func @_prenorm_linear_kernel(%arg0: i32, %arg1: i32, %arg2: memref<16x128xf32, #tpu.memory_space<vmem>>, %arg3: memref<1x128xf32, #tpu.memory_space<vmem>>, %arg4: memref<1x128xf32, #tpu.memory_space<vmem>>, %arg5: memref<128x128xbf16, #tpu.memory_space<vmem>>, %arg6: memref<1x128xf32, #tpu.memory_space<vmem>>, %arg7: memref<16x128xf32, #tpu.memory_space<vmem>>, %arg8: memref<16x128xbf16, #tpu.memory_space<vmem>>) attributes {dimension_semantics = [#tpu.dimension_semantics<parallel>, #tpu.dimension_semantics<arbitrary>], iteration_bounds = array<i64: 1, 1>, scalar_prefetch = 0 : i64, scratch_operands = 1 : i64, tpu.core_type = #tpu.core_type<tc>, window_params = [{transform_indices = @transform_0, window_bounds = array<i64: 16, 128>}, {pipeline_mode = #tpu.pipeline_mode<synchronous>, transform_indices = @transform_1, window_bounds = array<i64: 1, 128>}, {pipeline_mode = #tpu.pipeline_mode<synchronous>, transform_indices = @transform_2, window_bounds = array<i64: 1, 128>}, {transform_indices = @transform_3, window_bounds = array<i64: 128, 128>}, {transform_indices = @transform_4, window_bounds = array<i64: 1, 128>}, {transform_indices = @transform_5, window_bounds = array<i64: 16, 128>}]} {
    %c0_i32 = arith.constant 0 : i32
    %0 = arith.cmpi eq, %arg1, %c0_i32 : i32
    %1 = arith.extui %0 : i1 to i32
    %c0_i32_0 = arith.constant 0 : i32
    %2 = arith.cmpi ne, %1, %c0_i32_0 : i32
    scf.if %2 {
      %c0_8 = arith.constant 0 : index
      %c0_9 = arith.constant 0 : index
      %10 = vector.load %arg2[%c0_8, %c0_9] : memref<16x128xf32, #tpu.memory_space<vmem>>, vector<16x128xf32>
      %11 = tpu.iota {dimensions = array<i32: 1>} : vector<16x128xi32>
      %c32_i32 = arith.constant 32 : i32
      %12 = vector.broadcast %c32_i32 : i32 to vector<16x128xi32>
      %13 = arith.cmpi slt, %11, %12 : vector<16x128xi32>
      %cst_10 = arith.constant 0.000000e+00 : f32
      %14 = vector.broadcast %cst_10 : f32 to vector<16x128xf32>
      %15 = arith.select %13, %10, %14 : vector<16x128xi1>, vector<16x128xf32>
      %cst_11 = arith.constant dense<0.000000e+00> : vector<16xf32>
      %16 = vector.multi_reduction <add>, %15, %cst_11 [1] : vector<16x128xf32> to vector<16xf32>
      %17 = vector.shape_cast %16 : vector<16xf32> to vector<16x1xf32>
      %cst_12 = arith.constant 3.125000e-02 : f32
      %18 = vector.broadcast %cst_12 : f32 to vector<16x1xf32>
      %19 = arith.mulf %17, %18 : vector<16x1xf32>
      %20 = vector.broadcast %19 : vector<16x1xf32> to vector<16x128xf32>
      %21 = arith.subf %10, %20 : vector<16x128xf32>
      %cst_13 = arith.constant 0.000000e+00 : f32
      %22 = vector.broadcast %cst_13 : f32 to vector<16x128xf32>
      %23 = arith.select %13, %21, %22 : vector<16x128xi1>, vector<16x128xf32>
      %24 = arith.mulf %23, %23 : vector<16x128xf32>
      %cst_14 = arith.constant dense<0.000000e+00> : vector<16xf32>
      %25 = vector.multi_reduction <add>, %24, %cst_14 [1] : vector<16x128xf32> to vector<16xf32>
      %26 = vector.shape_cast %25 : vector<16xf32> to vector<16x1xf32>
      %cst_15 = arith.constant 3.125000e-02 : f32
      %27 = vector.broadcast %cst_15 : f32 to vector<16x1xf32>
      %28 = arith.mulf %26, %27 : vector<16x1xf32>
      %cst_16 = arith.constant 9.99999974E-6 : f32
      %29 = vector.broadcast %cst_16 : f32 to vector<16x1xf32>
      %30 = arith.addf %28, %29 : vector<16x1xf32>
      %31 = math.rsqrt %30 : vector<16x1xf32>
      %32 = vector.broadcast %31 : vector<16x1xf32> to vector<16x128xf32>
      %33 = arith.mulf %23, %32 : vector<16x128xf32>
      %c0_17 = arith.constant 0 : index
      %c0_18 = arith.constant 0 : index
      %34 = vector.load %arg3[%c0_17, %c0_18] : memref<1x128xf32, #tpu.memory_space<vmem>>, vector<1x128xf32>
      %35 = vector.broadcast %34 : vector<1x128xf32> to vector<16x128xf32>
      %36 = arith.mulf %33, %35 : vector<16x128xf32>
      %c0_19 = arith.constant 0 : index
      %c0_20 = arith.constant 0 : index
      %37 = vector.load %arg4[%c0_19, %c0_20] : memref<1x128xf32, #tpu.memory_space<vmem>>, vector<1x128xf32>
      %38 = vector.broadcast %37 : vector<1x128xf32> to vector<16x128xf32>
      %39 = arith.addf %36, %38 : vector<16x128xf32>
      %40 = arith.truncf %39 : vector<16x128xf32> to vector<16x128xbf16>
      %c0_21 = arith.constant 0 : index
      %c0_22 = arith.constant 0 : index
      %41 = vector.load %arg8[%c0_21, %c0_22] : memref<16x128xbf16, #tpu.memory_space<vmem>>, vector<16x128xbf16>
      tpu.vector_store %arg8[%c0_21, %c0_22], %40 {strides = array<i32>} : memref<16x128xbf16, #tpu.memory_space<vmem>>, vector<16x128xbf16>,
    } else {
    }
    %c0 = arith.constant 0 : index
    %c0_1 = arith.constant 0 : index
    %3 = vector.load %arg8[%c0, %c0_1] : memref<16x128xbf16, #tpu.memory_space<vmem>>, vector<16x128xbf16>
    %c0_2 = arith.constant 0 : index
    %c0_3 = arith.constant 0 : index
    %4 = vector.load %arg5[%c0_2, %c0_3] : memref<128x128xbf16, #tpu.memory_space<vmem>>, vector<128x128xbf16>
    %cst = arith.constant dense<0.000000e+00> : vector<16x128xf32>
    %5 = tpu.matmul %3, %4, %cst {dimension_numbers = #tpu.dot_dimension_numbers<[1], [0], [0], [1], [0, 0, 1, 1], [], []>} : vector<16x128xbf16>, vector<128x128xbf16>, vector<16x128xf32> -> vector<16x128xf32>
    %c0_4 = arith.constant 0 : index
    %c0_5 = arith.constant 0 : index
    %6 = vector.load %arg6[%c0_4, %c0_5] : memref<1x128xf32, #tpu.memory_space<vmem>>, vector<1x128xf32>
    %7 = vector.broadcast %6 : vector<1x128xf32> to vector<16x128xf32>
    %8 = arith.addf %5, %7 : vector<16x128xf32>
    %c0_6 = arith.constant 0 : index
    %c0_7 = arith.constant 0 : index
    %9 = vector.load %arg7[%c0_6, %c0_7] : memref<16x128xf32, #tpu.memory_space<vmem>>, vector<16x128xf32>
    tpu.vector_store %arg7[%c0_6, %c0_7], %8 {strides = array<i32>} : memref<16x128xf32, #tpu.memory_space<vmem>>, vector<16x128xf32>,
    return
  }
  func.func @transform_0(%arg0: i32, %arg1: i32) -> (i32, i32) {
    %c0_i32 = arith.constant 0 : i32
    %c0_i32_0 = arith.constant 0 : i32
    return %arg0, %c0_i32 : i32, i32
  }
  func.func @transform_1(%arg0: i32, %arg1: i32) -> (i32, i32) {
    %c0_i32 = arith.constant 0 : i32
    %c0_i32_0 = arith.constant 0 : i32
    %c0_i32_1 = arith.constant 0 : i32
    return %c0_i32, %c0_i32_0 : i32, i32
  }
  func.func @transform_2(%arg0: i32, %arg1: i32) -> (i32, i32) {
    %c0_i32 = arith.constant 0 : i32
    %c0_i32_0 = arith.constant 0 : i32
    %c0_i32_1 = arith.constant 0 : i32
    return %c0_i32, %c0_i32_0 : i32, i32
  }
  func.func @transform_3(%arg0: i32, %arg1: i32) -> (i32, i32) {
    %c0_i32 = arith.constant 0 : i32
    %c0_i32_0 = arith.constant 0 : i32
    return %c0_i32, %arg1 : i32, i32
  }
  func.func @transform_4(%arg0: i32, %arg1: i32) -> (i32, i32) {
    %c0_i32 = arith.constant 0 : i32
    %c0_i32_0 = arith.constant 0 : i32
    return %c0_i32, %arg1 : i32, i32
  }
  func.func @transform_5(%arg0: i32, %arg1: i32) -> (i32, i32) {
    %c0_i32 = arith.constant 0 : i32
    return %arg0, %arg1 : i32, i32
  }
}

</mosaic_0001>

<llo_original>
// kernel: tpu_custom_call.1
$region0: #{tpu_custom_call.1}
  #allocation0 [shape = 'u32[]', space=smem, size = 0x4, offset = 0x4, fixed_abs, tag = 'smem constant byte address 0x4 - core index']
  #allocation1 [shape = 'u32[72,128]{1,0:T(1,128)}', space=vmem, size = 0x9000, scoped, tag = 'internal scratch']
  #allocation2 [shape = 'bf16[16,128]{1,0:T(8,128)(2,1)}', space=vmem, size = 0x1000, scoped, tag = 'scratch operand']
  %s0 = inlined_call_operand.hbm [shape: f32[16,128], index: 0, kind: input, shape index: {}]
  %s1 = inlined_call_operand.hbm [shape: f32[1,128], index: 1, kind: input, shape index: {}]
  %s2 = inlined_call_operand.vmem [shape: f32[1,128], index: 2, kind: input, shape index: {}]
  %s3 = inlined_call_operand.hbm [shape: bf16[128,128], index: 3, kind: input, shape index: {}]
  %s4 = inlined_call_operand.vmem [shape: f32[1,128], index: 4, kind: input, shape index: {}]
  %s5 = inlined_call_operand.hbm [shape: f32[16,128], index: 5, kind: output, shape index: {}]
  %s6 = sld [smem:[#allocation0]]
  $region46: #{tpu_custom_call.1} parent=0
    _
  %s8 = ssub.s32 1, %s6
  %s9 = scalar_select 0, %s8, %s6
  $region1: #{tpu_custom_call.1} parent=0
    #allocation3 [shape = 'u8[8192]{0}', space=vmem, size = 0x2000, scoped, tag = 'input window, operand 0, single buffered']
    #allocation4 [shape = 's32[1]{0}', space=sflag, size = 0x4, scoped, tag = 'scoped memory for tpu_custom_call.1']
    #allocation5 [shape = 's32[1]{0}', space=sflag, size = 0x4, scoped, tag = 'scoped memory for tpu_custom_call.1']
    #allocation6 [shape = 'u8[512]{0}', space=vmem, size = 0x400, scoped, tag = 'input window, operand 1, single buffered']
    #allocation7 [shape = 's32[1]{0}', space=sflag, size = 0x4, scoped, tag = 'scoped memory for tpu_custom_call.1']
    #allocation8 [shape = 'u8[32768]{0}', space=vmem, size = 0x8000, scoped, tag = 'input window, operand 3, single buffered']
    #allocation9 [shape = 'u8[8192]{0}', space=vmem, size = 0x2000, scoped, tag = 'output window, operand 0, single buffered']
    %10 = vsyncpa [#allocation4], 0
    %11 = vsyncpa [#allocation7], 0
    %12 = vsyncpa [#allocation5], 0
    // Predicated region
    $region2: #{tpu_custom_call.1} parent=1 // pred_check
      _
    $region3: #{tpu_custom_call.1} parent=1 // pred_check_branch
      %14 = sbr.rel (0) target = $region5
    $region4: #{tpu_custom_call.1} parent=1 // pred_region
      %16 = vsyncadd [#allocation4], 0
      %s17 = sshll.u32 %s0, 4
      %s18 = int_to_ptr.hbm [resolvable:$true] %s17
      %s19 = sshll.u32 [#allocation3], 4
      %s20 = int_to_ptr.vmem [resolvable:$true] %s19
      %25 = dma.hbm_to_vmem [thread:$0]  %s18, 256, %s20, [#allocation4], 128, 128, 8
    $region5: #{tpu_custom_call.1} parent=1 // pred_fallthru
      _
    // Predicated region
    $region6: #{tpu_custom_call.1} parent=1 // pred_check
      _
    $region7: #{tpu_custom_call.1} parent=1 // pred_check_branch
      %27 = sbr.rel (0) target = $region9
    $region8: #{tpu_custom_call.1} parent=1 // pred_region
      %29 = vsyncadd [#allocation7], 0
      %s31 = sshll.u32 %s1, 4
      %s32 = int_to_ptr.hbm [resolvable:$true] %s31
      %s33 = sshll.u32 [#allocation6], 4
      %s34 = int_to_ptr.vmem [resolvable:$true] %s33
      %36 = dma.hbm_to_vmem [thread:$0]  %s32, 16, %s34, [#allocation7]
    $region9: #{tpu_custom_call.1} parent=1 // pred_fallthru
      _
    // Predicated region
    $region10: #{tpu_custom_call.1} parent=1 // pred_check
      _
    $region11: #{tpu_custom_call.1} parent=1 // pred_check_branch
      %38 = sbr.rel (0) target = $region13
    $region12: #{tpu_custom_call.1} parent=1 // pred_region
      _
    $region13: #{tpu_custom_call.1} parent=1 // pred_fallthru
      _
    // Predicated region
    $region14: #{tpu_custom_call.1} parent=1 // pred_check
      _
    $region15: #{tpu_custom_call.1} parent=1 // pred_check_branch
      %40 = sbr.rel (0) target = $region17
    $region16: #{tpu_custom_call.1} parent=1 // pred_region
      %42 = vsyncadd [#allocation7], 0
      %s43 = sshll.u32 %s3, 4
      %s44 = int_to_ptr.hbm [resolvable:$true] %s43
      %s45 = sshll.u32 [#allocation8], 4
      %s46 = int_to_ptr.vmem [resolvable:$true] %s45
      %51 = dma.hbm_to_vmem [thread:$0]  %s44, 1024, %s46, [#allocation7], 64, 64, 4
    $region17: #{tpu_custom_call.1} parent=1 // pred_fallthru
      _
    // Predicated region
    $region18: #{tpu_custom_call.1} parent=1 // pred_check
      _
    $region19: #{tpu_custom_call.1} parent=1 // pred_check_branch
      %53 = sbr.rel (0) target = $region21
    $region20: #{tpu_custom_call.1} parent=1 // pred_region
      _
    $region21: #{tpu_custom_call.1} parent=1 // pred_fallthru
      _
    // Predicated region
    $region22: #{tpu_custom_call.1} parent=1 // pred_check
      _
    $region23: #{tpu_custom_call.1} parent=1 // pred_check_branch
      %55 = sbr.rel (0) target = $region25
    $region24: #{tpu_custom_call.1} parent=1 // pred_region
      %57 = dma.done [#allocation4], 256
    $region25: #{tpu_custom_call.1} parent=1 // pred_fallthru
      _
    // Predicated region
    $region26: #{tpu_custom_call.1} parent=1 // pred_check
      _
    $region27: #{tpu_custom_call.1} parent=1 // pred_check_branch
      %59 = sbr.rel (0) target = $region29
    $region28: #{tpu_custom_call.1} parent=1 // pred_region
      %61 = dma.done [#allocation7], 16
    $region29: #{tpu_custom_call.1} parent=1 // pred_fallthru
      _
    // Predicated region
    $region30: #{tpu_custom_call.1} parent=1 // pred_check
      _
    $region31: #{tpu_custom_call.1} parent=1 // pred_check_branch
      %63 = sbr.rel (0) target = $region33
    $region32: #{tpu_custom_call.1} parent=1 // pred_region
      %65 = dma.done [#allocation7], 1024
    $region33: #{tpu_custom_call.1} parent=1 // pred_fallthru
      _
    %p66 = scmp.eq.s32.totalorder 0, 0
    // Predicated region
    $region34: #{tpu_custom_call.1} parent=1 // pred_check
      %p67 = pneg %p66
    $region35: #{tpu_custom_call.1} parent=1 // pred_check_branch
      %69 = sbr.rel (%p67) target = $region37
    $region36: #{tpu_custom_call.1} parent=1 // pred_region
      %v70 = vld [vmem:[#allocation3] sm:$0xff]
      %v71 = vld [vmem:[#allocation3 + $0x8] sm:$0xff]
      %v72 = vlaneseq
      %v73 = vand.u32 %v72, 127
      %vm74 = vcmp.lt.s32.totalorder %v73, 32
      %v75 = vsel %vm74, %v70, 0.0
      %v76 = vsel %vm74, %v71, 0.0
      %77 = vadd.xlane.f32.xlu0 %v75
      %v78 = vpop.xlane.xlu0 %77
      %79 = vadd.xlane.f32.xlu0 %v76
      %v80 = vpop.xlane.xlu0 %79
      %v81 = vmul.f32 %v78, 0.03125
      %v82 = vmul.f32 %v80, 0.03125
      %v83 = vsub.f32 %v70, %v81
      %v84 = vsub.f32 %v71, %v82
      %v85 = vsel %vm74, %v83, 0.0
      %v86 = vsel %vm74, %v84, 0.0
      %v87 = vmul.f32 %v85, %v85
      %v88 = vmul.f32 %v86, %v86
      %89 = vadd.xlane.f32.xlu0 %v87
      %v90 = vpop.xlane.xlu0 %89
      %91 = vadd.xlane.f32.xlu0 %v88
      %v92 = vpop.xlane.xlu0 %91
      %v93 = vmul.f32 %v90, 0.03125
      %v94 = vmul.f32 %v92, 0.03125
      %v95 = vadd.f32 %v93, 1e-05
      %v96 = vadd.f32 %v94, 1e-05
      %v97 = vrsqrt.pop %v95
      %v98 = vmul.f32 %v97, %v95
      %v99 = vmul.f32 %v98, %v97
      %v100 = vmul.f32 0.5, %v99
      %v101 = vsub.f32 1.5, %v100
      %v102 = vmul.f32 %v97, %v101
      %vm103 = vweird.f32 %v95
      %vm104 = vweird.f32 %v97
      %vm105 = vmor %vm103, %vm104
      %v106 = vsel %vm105, %v97, %v102
      %v107 = vrsqrt.pop %v96
      %v108 = vmul.f32 %v107, %v96
      %v109 = vmul.f32 %v108, %v107
      %v110 = vmul.f32 0.5, %v109
      %v111 = vsub.f32 1.5, %v110
      %v112 = vmul.f32 %v107, %v111
      %vm113 = vweird.f32 %v96
      %vm114 = vweird.f32 %v107
      %vm115 = vmor %vm113, %vm114
      %v116 = vsel %vm115, %v107, %v112
      %v117 = vmul.f32 %v85, %v106
      %v118 = vmul.f32 %v86, %v116
      %v119 = vld [vmem:[#allocation6] sm:$0x1]
      %v121 = vperm.slane %v119, 0
      %v123 = vmul.f32 %v117, %v121
      %v124 = vmul.f32 %v118, %v121
      %v125 = vld [vmem:[%s2] sm:$0x1]
      %v127 = vperm.slane %v125, 0
      %v129 = vadd.f32 %v123, %v127
      %v130 = vadd.f32 %v124, %v127
      %v131 = vpack.c.bf16 %v129, %v129
      %v132 = vpack.c.bf16 %v130, %v130
      %133 = vst [vmem:[#allocation2] sm:$0xf] %v131
      %134 = vst [vmem:[#allocation2 + $0x4] sm:$0xf] %v132
    $region37: #{tpu_custom_call.1} parent=1 // pred_fallthru
      _
    %v135 = vld [vmem:[#allocation2] sm:$0xf]
    %v136 = vld [vmem:[#allocation2 + $0x4] sm:$0xf]
    %v137 = vld [vmem:[#allocation8] sm:$0xf]
    %v138 = vld [vmem:[#allocation8 + $0x4] sm:$0xf]
    %v139 = vld [vmem:[#allocation8 + $0x8] sm:$0xf]
    %v140 = vld [vmem:[#allocation8 + $0xc] sm:$0xf]
    %v141 = vld [vmem:[#allocation8 + $0x10] sm:$0xf]
    %v142 = vld [vmem:[#allocation8 + $0x14] sm:$0xf]
    %v143 = vld [vmem:[#allocation8 + $0x18] sm:$0xf]
    %v144 = vld [vmem:[#allocation8 + $0x1c] sm:$0xf]
    %v145 = vld [vmem:[#allocation8 + $0x20] sm:$0xf]
    %v146 = vld [vmem:[#allocation8 + $0x24] sm:$0xf]
    %v147 = vld [vmem:[#allocation8 + $0x28] sm:$0xf]
    %v148 = vld [vmem:[#allocation8 + $0x2c] sm:$0xf]
    %v149 = vld [vmem:[#allocation8 + $0x30] sm:$0xf]
    %v150 = vld [vmem:[#allocation8 + $0x34] sm:$0xf]
    %v151 = vld [vmem:[#allocation8 + $0x38] sm:$0xf]
    %v152 = vld [vmem:[#allocation8 + $0x3c] sm:$0xf]
    %v153 = vld [vmem:[%s4] sm:$0x1]
    %v155 = vperm.slane %v153, 0
    %v159 = vunpack.c.l.b16 %v135
    %v160 = vunpack.c.l.b16 %v136
    %v161 = vpack.c.b16 %v160, %v159
    %v179 = vunpack.c.l.b16 %v137
    %v180 = vunpack.c.l.b16 %v138
    %v181 = vunpack.c.l.b16 %v139
    %v182 = vunpack.c.l.b16 %v140
    %v183 = vunpack.c.l.b16 %v141
    %v184 = vunpack.c.l.b16 %v142
    %v185 = vunpack.c.l.b16 %v143
    %v186 = vunpack.c.l.b16 %v144
    %v187 = vunpack.c.l.b16 %v145
    %v188 = vunpack.c.l.b16 %v146
    %v189 = vunpack.c.l.b16 %v147
    %v190 = vunpack.c.l.b16 %v148
    %v191 = vunpack.c.l.b16 %v149
    %v192 = vunpack.c.l.b16 %v150
    %v193 = vunpack.c.l.b16 %v151
    %v194 = vunpack.c.l.b16 %v152
    %v195 = vpack.c.b16 %v180, %v179
    %v196 = vpack.c.b16 %v182, %v181
    %v197 = vpack.c.b16 %v184, %v183
    %v198 = vpack.c.b16 %v186, %v185
    %v199 = vpack.c.b16 %v188, %v187
    %v200 = vpack.c.b16 %v190, %v189
    %v201 = vpack.c.b16 %v192, %v191
    %v202 = vpack.c.b16 %v194, %v193
    %211 = vmatpush.bf16.msra.mxu0 %v202
    %212 = vmatpush.bf16.msra.mxu0 %v201
    %213 = vmatpush.bf16.msra.mxu0 %v200
    %214 = vmatpush.bf16.msra.mxu0 %v199
    %215 = vmatpush.bf16.msra.mxu0 %v198
    %216 = vmatpush.bf16.msra.mxu0 %v197
    %217 = vmatpush.bf16.msra.mxu0 %v196
    %218 = vmatpush.bf16.msra.mxu0 %v195
    %219 = vmatmul.bf16.gmra.mxu0 %v161
    %v220 = vpop.f32.mrf.mxu0
    %v221 = vadd.f32 %v155, %v220
    %v222 = vpop.f32.mrf.mxu0
    %v223 = vadd.f32 %v155, %v222
    %224 = vdwg.mxu0
    %225 = vst [vmem:[#allocation9] sm:$0xff] %v221
    %226 = vst [vmem:[#allocation9 + $0x8] sm:$0xff] %v223
    // Predicated region
    $region38: #{tpu_custom_call.1} parent=1 // pred_check
      _
    $region39: #{tpu_custom_call.1} parent=1 // pred_check_branch
      %228 = sbr.rel (0) target = $region41
    $region40: #{tpu_custom_call.1} parent=1 // pred_region
      %230 = vsyncadd [#allocation5], 0
      %s231 = sshll.u32 [#allocation9], 4
      %s232 = int_to_ptr.vmem [resolvable:$true] %s231
      %s233 = sshll.u32 %s5, 4
      %s234 = int_to_ptr.hbm [resolvable:$true] %s233
      %239 = dma.vmem_to_hbm [thread:$0]  %s232, 256, %s234, [#allocation5], 128, 128, 8
    $region41: #{tpu_custom_call.1} parent=1 // pred_fallthru
      _
    // Predicated region
    $region42: #{tpu_custom_call.1} parent=1 // pred_check
      _
    $region43: #{tpu_custom_call.1} parent=1 // pred_check_branch
      %241 = sbr.rel (0) target = $region45
    $region44: #{tpu_custom_call.1} parent=1 // pred_region
      %243 = dma.done [#allocation5], 256
    $region45: #{tpu_custom_call.1} parent=1 // pred_fallthru
      _
    %244 = vsyncpa [#allocation4], 1
    %245 = vsyncpa [#allocation7], 1
    %246 = vsyncpa [#allocation5], 1

</llo_original>
